<compile_context>
chip_gen: v7x
topology: tpu7x:2x2x1
jax: 0.10.0
libtpu: 0.0.40
codegen_flags: <defaults>
</compile_context>

<pallas_src>
import functools

import jax
import jax.numpy as jnp
from jax.experimental import pallas as pl
from jax.experimental.pallas import tpu as pltpu

_INV_SQRT2 = 0.7071067811865476


def _round_up(x, m):
    return (x + m - 1) // m * m


def _mlp3d_kernel(x_ref, w1_ref, b1_ref, w2_ref, b2_ref, o_ref, acc_ref,
                  *, approx_gelu):
    # x_ref:  (C_in, TS)   bf16     w1_ref: (HK, C_in)  bf16   b1_ref: (HK, 1) f32
    # w2_ref: (C_out, HK)  bf16     b2_ref: (C_out, 1)  f32
    # o_ref:  (C_out, TS)           acc_ref: (C_out, TS) f32 scratch
    hk = pl.program_id(2)

    @pl.when(hk == 0)
    def _():
        acc_ref[...] = jnp.zeros_like(acc_ref)

    # fc1 (1x1x1 conv == channel matmul), f32 accumulation on the MXU.
    h = jnp.dot(w1_ref[...], x_ref[...], preferred_element_type=jnp.float32)
    h = h + b1_ref[...]
    if approx_gelu:
        # tanh approximation routes through the EUP slot (opt-in; slightly
        # different numerics than nn.GELU(approximate='none')).
        h = jax.nn.gelu(h, approximate=True)
    else:
        # Exact erf GELU in f32, matches torch.nn.GELU default.
        h = 0.5 * h * (1.0 + jax.lax.erf(h * jnp.float32(_INV_SQRT2)))

    # fc2: accumulate this hidden chunk's contribution in f32.
    acc_ref[...] += jnp.dot(w2_ref[...], h.astype(w2_ref.dtype),
                            preferred_element_type=jnp.float32)

    @pl.when(hk == pl.num_programs(2) - 1)
    def _():
        o_ref[...] = (acc_ref[...] + b2_ref[...]).astype(o_ref.dtype)


@functools.partial(jax.jit,
                   static_argnames=("ts", "hidden_chunk", "approx_gelu"))
def mlp3d_forward(x_ncdhw, w1, b1, w2, b2, *, ts=2048, hidden_chunk=512,
                  approx_gelu=False):
    """x_ncdhw: (N, C_in, D, H, W).
    w1: (hidden, C_in), b1: (hidden,), w2: (C_out, hidden), b2: (C_out,)
    (i.e. the squeezed Conv3d kernel_size=1 weights)."""
    n, c_in, d, h, w = x_ncdhw.shape
    hidden = w1.shape[0]
    c_out = w2.shape[0]
    s = d * h * w
    out_dtype = x_ncdhw.dtype

    # ---- spatial tiling: lane-dense, every tile full (no masked stores) ----
    ts = max(128, _round_up(ts, 128))
    tile = min(ts, _round_up(s, 128))
    s_pad = _round_up(s, tile)

    # ---- hidden chunking: bound the live intermediate & weight slabs ----
    if hidden <= hidden_chunk:
        chunk = hidden
        hidden_pad = hidden
    else:
        chunk = _round_up(hidden_chunk, 128)
        hidden_pad = _round_up(hidden, chunk)
    n_hk = hidden_pad // chunk

    # bf16 operands for the MXU; halves HBM traffic too. Zero-padding the
    # hidden dim is exact: padded rows give h=0 -> gelu(0)=0 -> zero columns
    # of W2 contribute nothing.
    x_flat = x_ncdhw.reshape(n, c_in, s).astype(jnp.bfloat16)
    if s_pad != s:
        x_flat = jnp.pad(x_flat, ((0, 0), (0, 0), (0, s_pad - s)))
    w1b = w1.astype(jnp.bfloat16)
    w2b = w2.astype(jnp.bfloat16)
    b1f = b1.astype(jnp.float32)
    b2f = b2.astype(jnp.float32)
    if hidden_pad != hidden:
        w1b = jnp.pad(w1b, ((0, hidden_pad - hidden), (0, 0)))
        b1f = jnp.pad(b1f, ((0, hidden_pad - hidden),))
        w2b = jnp.pad(w2b, ((0, 0), (0, hidden_pad - hidden)))
    b1_2d = b1f.reshape(hidden_pad, 1)
    b2_2d = b2f.reshape(c_out, 1)

    grid = (n, s_pad // tile, n_hk)

    itemsize_out = jnp.dtype(out_dtype).itemsize
    cost = pl.CostEstimate(
        flops=2 * n * s * hidden * (c_in + c_out),
        transcendentals=n * s * hidden,
        bytes_accessed=(x_flat.size * 2                      # bf16 input
                        + n * c_out * s * itemsize_out        # output
                        + w1b.size * 2 + w2b.size * 2         # bf16 weights
                        + (hidden_pad + c_out) * 4),          # f32 biases
    )

    kernel = functools.partial(_mlp3d_kernel, approx_gelu=approx_gelu)

    out_flat = pl.pallas_call(
        kernel,
        out_shape=jax.ShapeDtypeStruct((n, c_out, s_pad), out_dtype),
        grid_spec=pltpu.PrefetchScalarGridSpec(
            num_scalar_prefetch=0,
            grid=grid,
            in_specs=[
                # x tile: (C_in, TS), batch dim squeezed away; constant over
                # the hidden-chunk axis so it is not re-fetched per chunk.
                pl.BlockSpec((pl.Squeezed(), c_in, tile),
                             lambda b, j, k: (b, 0, j)),
                # W1 chunk: (chunk, C_in)
                pl.BlockSpec((chunk, c_in), lambda b, j, k: (k, 0)),
                # b1 chunk: (chunk, 1)
                pl.BlockSpec((chunk, 1), lambda b, j, k: (k, 0)),
                # W2 chunk: (C_out, chunk)
                pl.BlockSpec((c_out, chunk), lambda b, j, k: (0, k)),
                # b2: (C_out, 1), grid-constant
                pl.BlockSpec((c_out, 1), lambda b, j, k: (0, 0)),
            ],
            out_specs=pl.BlockSpec((pl.Squeezed(), c_out, tile),
                                   lambda b, j, k: (b, 0, j)),
            scratch_shapes=[pltpu.VMEM((c_out, tile), jnp.float32)],
        ),
        compiler_params=pltpu.CompilerParams(
            # batch / spatial tiles are independent -> shard across v7x's 2
            # TCs; hidden-chunk axis is a reduction -> arbitrary (innermost).
            dimension_semantics=("parallel", "parallel", "arbitrary"),
            # Raise v5e's 16 MiB scoped default; safely under v7x's 64 MiB
            # physical VMEM (budget: 2x x-tile + 2x out-tile + chunked weight
            # slabs + f32 accumulator stays far below this at default sizes).
            vmem_limit_bytes=48 * 1024 * 1024,
        ),
        cost_estimate=cost,
    )(x_flat, w1b, b1_2d, w2b, b2_2d)

    if s_pad != s:
        out_flat = out_flat[:, :, :s]
    # (N, C_out, S) -> NCDHW, a free reshape (no transpose).
    return out_flat.reshape(n, c_out, d, h, w)


def _reference(x_ncdhw, w1, b1, w2, b2):
    # Pure-JAX f32 reference of the PyTorch forward (1x1x1 conv == channel matmul).
    n, c_in, d, hh, ww = x_ncdhw.shape
    c_out = w2.shape[0]
    xf = x_ncdhw.reshape(n, c_in, -1)
    h = jnp.einsum("oi,nip->nop", w1, xf) + b1[None, :, None]
    h = jax.nn.gelu(h, approximate=False)
    o = jnp.einsum("oi,nip->nop", w2, h) + b2[None, :, None]
    return o.reshape(n, c_out, d, hh, ww)


if __name__ == "__main__":
    # Small shapes consistent with Mlp3D(in_features=16, hidden_features=32):
    # spatial extent D*H*W = 1024 -> one lane-dense 1024-wide tile per batch.
    N, C_IN, D, H, W = 2, 16, 4, 16, 16
    HIDDEN, C_OUT = 32, 16

    key = jax.random.PRNGKey(0)
    kx, kw1, kb1, kw2, kb2 = jax.random.split(key, 5)

    x = jax.random.normal(kx, (N, C_IN, D, H, W), dtype=jnp.float32)
    # Conv3d weights are (out, in, 1, 1, 1); store the squeezed (out, in) matrices.
    w1 = jax.random.normal(kw1, (HIDDEN, C_IN), dtype=jnp.float32) * 0.1
    b1 = jax.random.normal(kb1, (HIDDEN,), dtype=jnp.float32) * 0.1
    w2 = jax.random.normal(kw2, (C_OUT, HIDDEN), dtype=jnp.float32) * 0.1
    b2 = jax.random.normal(kb2, (C_OUT,), dtype=jnp.float32) * 0.1

    out = mlp3d_forward(x, w1, b1, w2, b2)
    out = jax.block_until_ready(out)

    ref = _reference(x, w1, b1, w2, b2)
    assert out.shape == (N, C_OUT, D, H, W), out.shape
    # bf16 MXU operands with f32 accumulation -> compare against the f32
    # reference with a bf16-appropriate tolerance.
    max_err = float(jnp.max(jnp.abs(out.astype(jnp.float32) - ref)))
    assert jnp.allclose(out.astype(jnp.float32), ref, atol=3e-2, rtol=3e-2), max_err
    print("KERNEL_OK")
</pallas_src>

<mosaic_0001>
module attributes {stable_mosaic.version = 11 : i64} {
  func.func @_mlp3d_kernel(%arg0: i32, %arg1: i32, %arg2: i32, %arg3: memref<1x16x1024xbf16, #tpu.memory_space<vmem>>, %arg4: memref<32x16xbf16, #tpu.memory_space<vmem>>, %arg5: memref<32x1xf32, #tpu.memory_space<vmem>>, %arg6: memref<16x32xbf16, #tpu.memory_space<vmem>>, %arg7: memref<16x1xf32, #tpu.memory_space<vmem>>, %arg8: memref<1x16x1024xf32, #tpu.memory_space<vmem>>, %arg9: memref<16x1024xf32, #tpu.memory_space<vmem>>) attributes {dimension_semantics = [#tpu.dimension_semantics<parallel>, #tpu.dimension_semantics<parallel>, #tpu.dimension_semantics<arbitrary>], iteration_bounds = array<i64: 2, 1, 1>, scalar_prefetch = 0 : i64, scratch_operands = 1 : i64, tpu.core_type = #tpu.core_type<tc>, window_params = [{transform_indices = @transform_0, window_bounds = array<i64: 1, 16, 1024>}, {transform_indices = @transform_1, window_bounds = array<i64: 32, 16>}, {transform_indices = @transform_2, window_bounds = array<i64: 32, 1>}, {transform_indices = @transform_3, window_bounds = array<i64: 16, 32>}, {pipeline_mode = #tpu.pipeline_mode<synchronous>, transform_indices = @transform_4, window_bounds = array<i64: 16, 1>}, {transform_indices = @transform_5, window_bounds = array<i64: 1, 16, 1024>}]} {
    %c0_i32 = arith.constant 0 : i32
    %0 = arith.cmpi eq, %arg2, %c0_i32 : i32
    %1 = arith.extui %0 : i1 to i32
    %c0_i32_0 = arith.constant 0 : i32
    %2 = arith.cmpi ne, %1, %c0_i32_0 : i32
    scf.if %2 {
      %cst_19 = arith.constant 0.000000e+00 : f32
      %27 = vector.broadcast %cst_19 : f32 to vector<16x1024xf32>
      %c0_20 = arith.constant 0 : index
      %c0_21 = arith.constant 0 : index
      %28 = vector.load %arg9[%c0_20, %c0_21] : memref<16x1024xf32, #tpu.memory_space<vmem>>, vector<16x1024xf32>
      tpu.vector_store %arg9[%c0_20, %c0_21], %27 {strides = array<i32>} : memref<16x1024xf32, #tpu.memory_space<vmem>>, vector<16x1024xf32>,
    } else {
    }
    %c0 = arith.constant 0 : index
    %c0_1 = arith.constant 0 : index
    %3 = vector.load %arg4[%c0, %c0_1] : memref<32x16xbf16, #tpu.memory_space<vmem>>, vector<32x16xbf16>
    %c0_2 = arith.constant 0 : index
    %c0_3 = arith.constant 0 : index
    %c0_4 = arith.constant 0 : index
    %4 = vector.load %arg3[%c0_2, %c0_3, %c0_4] : memref<1x16x1024xbf16, #tpu.memory_space<vmem>>, vector<1x16x1024xbf16>
    %5 = vector.shape_cast %4 : vector<1x16x1024xbf16> to vector<16x1024xbf16>
    %cst = arith.constant dense<0.000000e+00> : vector<32x1024xf32>
    %6 = tpu.matmul %3, %5, %cst {dimension_numbers = #tpu.dot_dimension_numbers<[1], [0], [0], [1], [0, 0, 1, 1], [], []>} : vector<32x16xbf16>, vector<16x1024xbf16>, vector<32x1024xf32> -> vector<32x1024xf32>
    %c0_5 = arith.constant 0 : index
    %c0_6 = arith.constant 0 : index
    %7 = vector.load %arg5[%c0_5, %c0_6] : memref<32x1xf32, #tpu.memory_space<vmem>>, vector<32x1xf32>
    %8 = vector.broadcast %7 : vector<32x1xf32> to vector<32x1024xf32>
    %9 = arith.addf %6, %8 : vector<32x1024xf32>
    %cst_7 = arith.constant 5.000000e-01 : f32
    %10 = vector.broadcast %cst_7 : f32 to vector<32x1024xf32>
    %11 = arith.mulf %10, %9 : vector<32x1024xf32>
    %cst_8 = arith.constant 0.707106769 : f32
    %12 = vector.broadcast %cst_8 : f32 to vector<32x1024xf32>
    %13 = arith.mulf %9, %12 : vector<32x1024xf32>
    %14 = math.erf %13 : vector<32x1024xf32>
    %cst_9 = arith.constant 1.000000e+00 : f32
    %15 = vector.broadcast %cst_9 : f32 to vector<32x1024xf32>
    %16 = arith.addf %15, %14 : vector<32x1024xf32>
    %17 = arith.mulf %11, %16 : vector<32x1024xf32>
    %c0_10 = arith.constant 0 : index
    %c0_11 = arith.constant 0 : index
    %18 = vector.load %arg9[%c0_10, %c0_11] : memref<16x1024xf32, #tpu.memory_space<vmem>>, vector<16x1024xf32>
    %c0_12 = arith.constant 0 : index
    %c0_13 = arith.constant 0 : index
    %19 = vector.load %arg6[%c0_12, %c0_13] : memref<16x32xbf16, #tpu.memory_space<vmem>>, vector<16x32xbf16>
    %20 = arith.truncf %17 : vector<32x1024xf32> to vector<32x1024xbf16>
    %cst_14 = arith.constant dense<0.000000e+00> : vector<16x1024xf32>
    %21 = tpu.matmul %19, %20, %cst_14 {dimension_numbers = #tpu.dot_dimension_numbers<[1], [0], [0], [1], [0, 0, 1, 1], [], []>} : vector<16x32xbf16>, vector<32x1024xbf16>, vector<16x1024xf32> -> vector<16x1024xf32>
    %22 = arith.addf %18, %21 : vector<16x1024xf32>
    %c0_15 = arith.constant 0 : index
    %c0_16 = arith.constant 0 : index
    %23 = vector.load %arg9[%c0_15, %c0_16] : memref<16x1024xf32, #tpu.memory_space<vmem>>, vector<16x1024xf32>
    tpu.vector_store %arg9[%c0_15, %c0_16], %22 {strides = array<i32>} : memref<16x1024xf32, #tpu.memory_space<vmem>>, vector<16x1024xf32>,
    %c0_i32_17 = arith.constant 0 : i32
    %24 = arith.cmpi eq, %arg2, %c0_i32_17 : i32
    %25 = arith.extui %24 : i1 to i32
    %c0_i32_18 = arith.constant 0 : i32
    %26 = arith.cmpi ne, %25, %c0_i32_18 : i32
    scf.if %26 {
      %c0_19 = arith.constant 0 : index
      %c0_20 = arith.constant 0 : index
      %27 = vector.load %arg9[%c0_19, %c0_20] : memref<16x1024xf32, #tpu.memory_space<vmem>>, vector<16x1024xf32>
      %c0_21 = arith.constant 0 : index
      %c0_22 = arith.constant 0 : index
      %28 = vector.load %arg7[%c0_21, %c0_22] : memref<16x1xf32, #tpu.memory_space<vmem>>, vector<16x1xf32>
      %29 = vector.broadcast %28 : vector<16x1xf32> to vector<16x1024xf32>
      %30 = arith.addf %27, %29 : vector<16x1024xf32>
      %c0_23 = arith.constant 0 : index
      %c0_24 = arith.constant 0 : index
      %c0_25 = arith.constant 0 : index
      %31 = vector.load %arg8[%c0_23, %c0_24, %c0_25] : memref<1x16x1024xf32, #tpu.memory_space<vmem>>, vector<1x16x1024xf32>
      %32 = vector.shape_cast %31 : vector<1x16x1024xf32> to vector<16x1024xf32>
      %33 = vector.shape_cast %30 : vector<16x1024xf32> to vector<1x16x1024xf32>
      tpu.vector_store %arg8[%c0_23, %c0_24, %c0_25], %33 {strides = array<i32>} : memref<1x16x1024xf32, #tpu.memory_space<vmem>>, vector<1x16x1024xf32>,
    } else {
    }
    return
  }
  func.func @transform_0(%arg0: i32, %arg1: i32, %arg2: i32) -> (i32, i32, i32) {
    %c0_i32 = arith.constant 0 : i32
    %c0_i32_0 = arith.constant 0 : i32
    return %arg0, %c0_i32, %arg1 : i32, i32, i32
  }
  func.func @transform_1(%arg0: i32, %arg1: i32, %arg2: i32) -> (i32, i32) {
    %c0_i32 = arith.constant 0 : i32
    %c0_i32_0 = arith.constant 0 : i32
    return %arg2, %c0_i32 : i32, i32
  }
  func.func @transform_2(%arg0: i32, %arg1: i32, %arg2: i32) -> (i32, i32) {
    %c0_i32 = arith.constant 0 : i32
    %c0_i32_0 = arith.constant 0 : i32
    return %arg2, %c0_i32 : i32, i32
  }
  func.func @transform_3(%arg0: i32, %arg1: i32, %arg2: i32) -> (i32, i32) {
    %c0_i32 = arith.constant 0 : i32
    %c0_i32_0 = arith.constant 0 : i32
    return %c0_i32, %arg2 : i32, i32
  }
  func.func @transform_4(%arg0: i32, %arg1: i32, %arg2: i32) -> (i32, i32) {
    %c0_i32 = arith.constant 0 : i32
    %c0_i32_0 = arith.constant 0 : i32
    %c0_i32_1 = arith.constant 0 : i32
    return %c0_i32, %c0_i32_0 : i32, i32
  }
  func.func @transform_5(%arg0: i32, %arg1: i32, %arg2: i32) -> (i32, i32, i32) {
    %c0_i32 = arith.constant 0 : i32
    %c0_i32_0 = arith.constant 0 : i32
    return %arg0, %c0_i32, %arg1 : i32, i32, i32
  }
}

</mosaic_0001>

<llo_original>
// kernel: mlp3d_forward.1
$region0: #{mlp3d_forward.1}
  #allocation0 [shape = 'u32[]', space=smem, size = 0x4, offset = 0x4, fixed_abs, tag = 'smem constant byte address 0x4 - core index']
  #allocation1 [shape = 'u32[144,128]{1,0:T(1,128)}', space=vmem, size = 0x12000, scoped, tag = 'internal scratch']
  #allocation2 [shape = 'f32[16,1024]{1,0:T(8,128)}', space=vmem, size = 0x10000, scoped, tag = 'scratch operand']
  %s0 = inlined_call_operand.vmem [shape: bf16[2,16,1024], index: 0, kind: input, shape index: {}]
  %s1 = inlined_call_operand.vmem [shape: bf16[32,16], index: 1, kind: input, shape index: {}]
  %s2 = inlined_call_operand.vmem [shape: f32[32,1], index: 2, kind: input, shape index: {}]
  %s3 = inlined_call_operand.vmem [shape: bf16[16,32], index: 3, kind: input, shape index: {}]
  %s4 = inlined_call_operand.vmem [shape: f32[16,1], index: 4, kind: input, shape index: {}]
  %s5 = inlined_call_operand.vmem [shape: f32[2,16,1024], index: 5, kind: output, shape index: {}]
  %s6 = sld [smem:[#allocation0]]
  $region61: #{mlp3d_forward.1} parent=0
    _
  %s8 = ssub.s32 1, %s6
  %s9 = scalar_select 0, %s8, %s6
  loop: start=0, step=1, limit=4
  $region2: #{mlp3d_forward.1} parent=0 // loop_pre_header
    _
  $region3: #{mlp3d_forward.1} parent=0 // loop_header
    %s11 = sphi 0, %s15
    %p12 = scmp.ge.s32.totalorder %s11, 4
    %s18 = sphi 0, %s37
    %s19 = sphi 0, %s33
    %s20 = sphi 0, %s29
    %s21 = sphi 0, %s18
    %s22 = sphi 0, %s19
    %s23 = sphi 0, %s20
    %s24 = sphi 0, %s21
    %s25 = sphi 0, %s22
    %s26 = sphi 0, %s23
    %s42 = sphi 0, %s44
    %s45 = sphi 0, %s42
    %s46 = sphi 0, %s45
    %s62 = sphi 0, %s46
    %s68 = sphi 0, %s70
    %s71 = sphi 0, %s68
    %s72 = sphi 0, %s71
    %s88 = sphi 0, %s72
    %s94 = sphi 0, %s96
    %s97 = sphi 0, %s94
    %s98 = sphi 0, %s97
    %s114 = sphi 0, %s98
    %s120 = sphi 0, %s122
    %s123 = sphi 0, %s120
    %s124 = sphi 0, %s123
    %s140 = sphi 0, %s124
    %s144 = sphi 0, %s144
    %s146 = sphi 0, %s144
    %s147 = sphi 0, %s146
    %s161 = sphi 0, %s147
    %s169 = sphi 0, %s171
    %s172 = sphi 0, %s169
    %s173 = sphi 0, %s172
    %s189 = sphi 0, %s173
  $region4: #{mlp3d_forward.1} parent=0 // loop_header_branch
    %14 = sbr.rel (%p12) target = $region8
  $region5: #{mlp3d_forward.1} parent=0 // loop_body
    %s16 = ssub.s32 %s11, 1
    %s17 = ssub.s32 %s11, 2
    %s27 = sadd.s32 1, %s20
    %p28 = scmp.ge.s32.totalorder %s27, 1
    %s29 = scalar_select %p28, 0, %s27
    %s30 = sadd.s32 1, %s19
    %s31 = scalar_select %p28, %s30, %s19
    %p32 = scmp.ge.s32.totalorder %s31, 1
    %s33 = scalar_select %p32, 0, %s31
    %s34 = sadd.s32 1, %s18
    %s35 = scalar_select %p32, %s34, %s18
    %p36 = scmp.ge.s32.totalorder %s35, 2
    %s37 = scalar_select %p36, 0, %s35
    %s38 = ssub.s32 %s18, %s37
    %s39 = ssub.s32 %s19, %s33
    %s40 = sor.u32 %s38, %s39
    %p41 = scmp.eq.s32.totalorder %s40, 0
    %s43 = sadd.s32 %s42, 1
    %s44 = scalar_select %p41, %s42, %s43
    %p47 = pneg %p41
    %p48 = scmp.eq.s32.totalorder %s11, 1
    %p49 = por %p47, %p48
    %p50 = scmp.ne.s32.totalorder %s42, %s45
    %p51 = scmp.eq.s32.totalorder %s11, 0
    %p52 = por %p50, %p51
    %p53 = scmp.ne.s32.totalorder %s42, %s45
    %p54 = scmp.eq.s32.totalorder %s16, 1
    %p55 = por %p53, %p54
    %p56 = scmp.ne.s32.totalorder %s45, %s46
    %p57 = scmp.eq.s32.totalorder %s16, 0
    %p58 = por %p56, %p57
    %p59 = scmp.ne.s32.totalorder %s45, %s46
    %p60 = scmp.eq.s32.totalorder %s17, 1
    %p61 = por %p59, %p60
    %p63 = scmp.ne.s32.totalorder %s46, %s62
    %p64 = scmp.eq.s32.totalorder %s17, 0
    %p65 = por %p63, %p64
    %s66 = ssub.s32 %s20, %s29
    %p67 = scmp.eq.s32.totalorder %s66, 0
    %s69 = sadd.s32 %s68, 1
    %s70 = scalar_select %p67, %s68, %s69
    %p73 = pneg %p67
    %p74 = scmp.eq.s32.totalorder %s11, 1
    %p75 = por %p73, %p74
    %p76 = scmp.ne.s32.totalorder %s68, %s71
    %p77 = scmp.eq.s32.totalorder %s11, 0
    %p78 = por %p76, %p77
    %p79 = scmp.ne.s32.totalorder %s68, %s71
    %p80 = scmp.eq.s32.totalorder %s16, 1
    %p81 = por %p79, %p80
    %p82 = scmp.ne.s32.totalorder %s71, %s72
    %p83 = scmp.eq.s32.totalorder %s16, 0
    %p84 = por %p82, %p83
    %p85 = scmp.ne.s32.totalorder %s71, %s72
    %p86 = scmp.eq.s32.totalorder %s17, 1
    %p87 = por %p85, %p86
    %p89 = scmp.ne.s32.totalorder %s72, %s88
    %p90 = scmp.eq.s32.totalorder %s17, 0
    %p91 = por %p89, %p90
    %s92 = ssub.s32 %s20, %s29
    %p93 = scmp.eq.s32.totalorder %s92, 0
    %s95 = sadd.s32 %s94, 1
    %s96 = scalar_select %p93, %s94, %s95
    %p99 = pneg %p93
    %p100 = scmp.eq.s32.totalorder %s11, 1
    %p101 = por %p99, %p100
    %p102 = scmp.ne.s32.totalorder %s94, %s97
    %p103 = scmp.eq.s32.totalorder %s11, 0
    %p104 = por %p102, %p103
    %p105 = scmp.ne.s32.totalorder %s94, %s97
    %p106 = scmp.eq.s32.totalorder %s16, 1
    %p107 = por %p105, %p106
    %p108 = scmp.ne.s32.totalorder %s97, %s98
    %p109 = scmp.eq.s32.totalorder %s16, 0
    %p110 = por %p108, %p109
    %p111 = scmp.ne.s32.totalorder %s97, %s98
    %p112 = scmp.eq.s32.totalorder %s17, 1
    %p113 = por %p111, %p112
    %p115 = scmp.ne.s32.totalorder %s98, %s114
    %p116 = scmp.eq.s32.totalorder %s17, 0
    %p117 = por %p115, %p116
    %s118 = ssub.s32 %s20, %s29
    %p119 = scmp.eq.s32.totalorder %s118, 0
    %s121 = sadd.s32 %s120, 1
    %s122 = scalar_select %p119, %s120, %s121
    %p125 = pneg %p119
    %p126 = scmp.eq.s32.totalorder %s11, 1
    %p127 = por %p125, %p126
    %p128 = scmp.ne.s32.totalorder %s120, %s123
    %p129 = scmp.eq.s32.totalorder %s11, 0
    %p130 = por %p128, %p129
    %p131 = scmp.ne.s32.totalorder %s120, %s123
    %p132 = scmp.eq.s32.totalorder %s16, 1
    %p133 = por %p131, %p132
    %p134 = scmp.ne.s32.totalorder %s123, %s124
    %p135 = scmp.eq.s32.totalorder %s16, 0
    %p136 = por %p134, %p135
    %p137 = scmp.ne.s32.totalorder %s123, %s124
    %p138 = scmp.eq.s32.totalorder %s17, 1
    %p139 = por %p137, %p138
    %p141 = scmp.ne.s32.totalorder %s124, %s140
    %p142 = scmp.eq.s32.totalorder %s17, 0
    %p143 = por %p141, %p142
    %s145 = sadd.s32 %s144, 1
    %p148 = scmp.eq.s32.totalorder %s11, 1
    %p149 = scmp.ne.s32.totalorder %s144, %s146
    %p150 = scmp.eq.s32.totalorder %s11, 0
    %p151 = por %p149, %p150
    %p152 = scmp.ne.s32.totalorder %s144, %s146
    %p153 = scmp.eq.s32.totalorder %s16, 1
    %p154 = por %p152, %p153
    %p155 = scmp.ne.s32.totalorder %s146, %s147
    %p156 = scmp.eq.s32.totalorder %s16, 0
    %p157 = por %p155, %p156
    %p158 = scmp.ne.s32.totalorder %s146, %s147
    %p159 = scmp.eq.s32.totalorder %s17, 1
    %p160 = por %p158, %p159
    %p162 = scmp.ne.s32.totalorder %s147, %s161
    %p163 = scmp.eq.s32.totalorder %s17, 0
    %p164 = por %p162, %p163
    %s165 = ssub.s32 %s18, %s37
    %s166 = ssub.s32 %s19, %s33
    %s167 = sor.u32 %s165, %s166
    %p168 = scmp.eq.s32.totalorder %s167, 0
    %s170 = sadd.s32 %s169, 1
    %s171 = scalar_select %p168, %s169, %s170
    %p174 = pneg %p168
    %p175 = scmp.eq.s32.totalorder %s11, 1
    %p176 = por %p174, %p175
    %p177 = scmp.ne.s32.totalorder %s169, %s172
    %p178 = scmp.eq.s32.totalorder %s11, 0
    %p179 = por %p177, %p178
    %p180 = scmp.ne.s32.totalorder %s169, %s172
    %p181 = scmp.eq.s32.totalorder %s16, 1
    %p182 = por %p180, %p181
    %p183 = scmp.ne.s32.totalorder %s172, %s173
    %p184 = scmp.eq.s32.totalorder %s16, 0
    %p185 = por %p183, %p184
    %p186 = scmp.ne.s32.totalorder %s172, %s173
    %p187 = scmp.eq.s32.totalorder %s17, 1
    %p188 = por %p186, %p187
    %p190 = scmp.ne.s32.totalorder %s173, %s189
    %p191 = scmp.eq.s32.totalorder %s17, 0
    %p192 = por %p190, %p191
    %p193 = scmp.le.s32.totalorder 1, %s11
    %p194 = scmp.lt.s32.totalorder %s11, 3
    %p195 = pnand %p193, %p194
    %p196 = pneg %p195
    // Predicated region
    $region9: #{mlp3d_forward.1} parent=5 // pred_check
      _
    $region10: #{mlp3d_forward.1} parent=5 // pred_check_branch
      %198 = sbr.rel (%p195) target = $region12
    $region11: #{mlp3d_forward.1} parent=5 // pred_region
      %s199 = ssub.s32 %s11, 1
      // Predicated region
      $region13: #{mlp3d_forward.1} parent=11 // pred_check
        %p200 = pneg %p84
      $region14: #{mlp3d_forward.1} parent=11 // pred_check_branch
        %202 = sbr.rel (%p200) target = $region16
      $region15: #{mlp3d_forward.1} parent=11 // pred_region
        %s203 = smul.u32 4, %s23
        %p204 = scmp.lt.s32.totalorder %s203, 3
        %s205 = scalar_select %p204, %s203, 3
        %s206 = smul.addr %s205, 4
        %s207 = scalar_lea.vmem %s1, %s206
        %s208 = smul.u32 4, %s23
      $region16: #{mlp3d_forward.1} parent=11 // pred_fallthru
        _
      // Predicated region
      $region17: #{mlp3d_forward.1} parent=11 // pred_check
        %p209 = pneg %p110
      $region18: #{mlp3d_forward.1} parent=11 // pred_check_branch
        %211 = sbr.rel (%p209) target = $region20
      $region19: #{mlp3d_forward.1} parent=11 // pred_region
        %s212 = smul.u32 4, %s23
        %p213 = scmp.lt.s32.totalorder %s212, 3
        %s214 = scalar_select %p213, %s212, 3
        %s215 = smul.addr %s214, 8
        %s216 = scalar_lea.vmem %s2, %s215
        %s217 = smul.u32 4, %s23
      $region20: #{mlp3d_forward.1} parent=11 // pred_fallthru
        _
      // Predicated region
      $region21: #{mlp3d_forward.1} parent=11 // pred_check
        %p218 = pneg %p136
      $region22: #{mlp3d_forward.1} parent=11 // pred_check_branch
        %220 = sbr.rel (%p218) target = $region24
      $region23: #{mlp3d_forward.1} parent=11 // pred_region
        %p221 = scmp.lt.s32.totalorder %s23, 0
        %s222 = scalar_select %p221, %s23, 0
        %s223 = smul.addr %s222, 4
        %s224 = scalar_lea.vmem %s3, %s223
      $region24: #{mlp3d_forward.1} parent=11 // pred_fallthru
        _
      // Predicated region
      $region25: #{mlp3d_forward.1} parent=11 // pred_check
        %p225 = pneg %p157
      $region26: #{mlp3d_forward.1} parent=11 // pred_check_branch
        %227 = sbr.rel (%p225) target = $region28
      $region27: #{mlp3d_forward.1} parent=11 // pred_region
        _
      $region28: #{mlp3d_forward.1} parent=11 // pred_fallthru
        _
    $region12: #{mlp3d_forward.1} parent=5 // pred_fallthru
      _
    %p228 = scmp.lt.s32.totalorder %s11, 2
    // Predicated region
    $region29: #{mlp3d_forward.1} parent=5 // pred_check
      %p229 = pneg %p228
    $region30: #{mlp3d_forward.1} parent=5 // pred_check_branch
      %231 = sbr.rel (%p229) target = $region32
    $region31: #{mlp3d_forward.1} parent=5 // pred_region
      // Predicated region
      $region33: #{mlp3d_forward.1} parent=31 // pred_check
        %p232 = pneg %p52
      $region34: #{mlp3d_forward.1} parent=31 // pred_check_branch
        %234 = sbr.rel (%p232) target = $region36
      $region35: #{mlp3d_forward.1} parent=31 // pred_region
        %s235 = smul.u32 8, %s19
        %p236 = scmp.lt.s32.totalorder %s18, 1
        %s237 = scalar_select %p236, %s18, 1
        %p238 = scmp.lt.s32.totalorder %s235, 7
        %s239 = scalar_select %p238, %s235, 7
        %s240 = smul.addr %s237, 16
        %s241 = sadd.s32 %s239, %s240
        %s242 = smul.addr %s241, 4
        %s243 = scalar_lea.vmem %s0, %s242
        %s244 = smul.u32 8, %s19
      $region36: #{mlp3d_forward.1} parent=31 // pred_fallthru
        _
    $region32: #{mlp3d_forward.1} parent=5 // pred_fallthru
      _
    %p245 = scmp.le.s32.totalorder 1, %s11
    %p246 = scmp.lt.s32.totalorder %s11, 3
    %p247 = pnand %p245, %p246
    %p248 = pneg %p247
    // Predicated region
    $region37: #{mlp3d_forward.1} parent=5 // pred_check
      _
    $region38: #{mlp3d_forward.1} parent=5 // pred_check_branch
      %250 = sbr.rel (%p247) target = $region40
    $region39: #{mlp3d_forward.1} parent=5 // pred_region
      %s251 = ssub.s32 %s11, 1
      %s252 = smul.u32 8, %s22
      %p253 = scmp.lt.s32.totalorder %s21, 1
      %s254 = scalar_select %p253, %s21, 1
      %p255 = scmp.lt.s32.totalorder %s252, 7
      %s256 = scalar_select %p255, %s252, 7
      %s257 = smul.addr %s254, 16
      %s258 = sadd.s32 %s256, %s257
      %s259 = smul.addr %s258, 4
      %s260 = scalar_lea.vmem %s0, %s259
      %p261 = pneg %p58
      %p262 = pneg %p55
      %s263 = smul.u32 4, %s23
      %p264 = scmp.lt.s32.totalorder %s263, 3
      %s265 = scalar_select %p264, %s263, 3
      %s266 = smul.addr %s265, 4
      %s267 = scalar_lea.vmem %s1, %s266
      %p268 = pneg %p84
      %p269 = pneg %p81
      %s270 = smul.u32 4, %s23
      %p271 = scmp.lt.s32.totalorder %s270, 3
      %s272 = scalar_select %p271, %s270, 3
      %s273 = smul.addr %s272, 8
      %s274 = scalar_lea.vmem %s2, %s273
      %p275 = pneg %p110
      %p276 = pneg %p107
      %p277 = scmp.lt.s32.totalorder %s23, 0
      %s278 = scalar_select %p277, %s23, 0
      %s279 = smul.addr %s278, 4
      %s280 = scalar_lea.vmem %s3, %s279
      %p281 = pneg %p136
      %p282 = pneg %p133
      %p283 = pneg %p157
      %p284 = pneg %p154
      %p285 = pneg %p185
      %p286 = pneg %p182
      %s287 = smul.u32 8, %s22
      %p288 = scmp.lt.s32.totalorder %s21, 1
      %s289 = scalar_select %p288, %s21, 1
      %p290 = scmp.lt.s32.totalorder %s287, 7
      %s291 = scalar_select %p290, %s287, 7
      %s292 = smul.addr %s289, 16
      %s293 = sadd.s32 %s291, %s292
      %s294 = smul.addr %s293, 8
      %s295 = scalar_lea.vmem %s5, %s294
      %s296 = smul.u32 8, %s22
      %p297 = scmp.lt.s32.totalorder %s21, 1
      %s298 = scalar_select %p297, %s21, 1
      %p299 = scmp.lt.s32.totalorder %s296, 7
      %s300 = scalar_select %p299, %s296, 7
      %s301 = smul.addr %s298, 16
      %s302 = sadd.s32 %s300, %s301
      %s303 = smul.addr %s302, 4
      %s304 = scalar_lea.vmem %s0, %s303
      %s305 = smul.u32 8, %s22
      %s306 = smul.u32 4, %s23
      %p307 = scmp.lt.s32.totalorder %s306, 3
      %s308 = scalar_select %p307, %s306, 3
      %s309 = smul.addr %s308, 4
      %s310 = scalar_lea.vmem %s1, %s309
      %s311 = smul.u32 4, %s23
      %s312 = smul.u32 4, %s23
      %p313 = scmp.lt.s32.totalorder %s312, 3
      %s314 = scalar_select %p313, %s312, 3
      %s315 = smul.addr %s314, 8
      %s316 = scalar_lea.vmem %s2, %s315
      %s317 = smul.u32 4, %s23
      %p318 = scmp.lt.s32.totalorder %s23, 0
      %s319 = scalar_select %p318, %s23, 0
      %s320 = smul.addr %s319, 4
      %s321 = scalar_lea.vmem %s3, %s320
      %s322 = smul.u32 8, %s22
      %p323 = scmp.lt.s32.totalorder %s21, 1
      %s324 = scalar_select %p323, %s21, 1
      %p325 = scmp.lt.s32.totalorder %s322, 7
      %s326 = scalar_select %p325, %s322, 7
      %s327 = smul.addr %s324, 16
      %s328 = sadd.s32 %s326, %s327
      %s329 = smul.addr %s328, 8
      %s330 = scalar_lea.vmem %s5, %s329
      %s331 = smul.u32 8, %s22
      %p333 = scmp.eq.s32.totalorder %s23, 0
      // Predicated region
      $region41: #{mlp3d_forward.1} parent=39 // pred_check
        %p334 = pneg %p333
      $region42: #{mlp3d_forward.1} parent=39 // pred_check_branch
        %336 = sbr.rel (%p334) target = $region44
      $region43: #{mlp3d_forward.1} parent=39 // pred_region
        %337 = vst [vmem:[#allocation2] sm:$0xff] 0.0
        %338 = vst [vmem:[#allocation2 + $0x8] sm:$0xff] 0.0
        %339 = vst [vmem:[#allocation2 + $0x10] sm:$0xff] 0.0
        %340 = vst [vmem:[#allocation2 + $0x18] sm:$0xff] 0.0
        %341 = vst [vmem:[#allocation2 + $0x20] sm:$0xff] 0.0
        %342 = vst [vmem:[#allocation2 + $0x28] sm:$0xff] 0.0
        %343 = vst [vmem:[#allocation2 + $0x30] sm:$0xff] 0.0
        %344 = vst [vmem:[#allocation2 + $0x38] sm:$0xff] 0.0
        %345 = vst [vmem:[#allocation2 + $0x40] sm:$0xff] 0.0
        %346 = vst [vmem:[#allocation2 + $0x48] sm:$0xff] 0.0
        %347 = vst [vmem:[#allocation2 + $0x50] sm:$0xff] 0.0
        %348 = vst [vmem:[#allocation2 + $0x58] sm:$0xff] 0.0
        %349 = vst [vmem:[#allocation2 + $0x60] sm:$0xff] 0.0
        %350 = vst [vmem:[#allocation2 + $0x68] sm:$0xff] 0.0
        %351 = vst [vmem:[#allocation2 + $0x70] sm:$0xff] 0.0
        %352 = vst [vmem:[#allocation2 + $0x78] sm:$0xff] 0.0
      $region44: #{mlp3d_forward.1} parent=39 // pred_fallthru
        _
      %v353 = vld [vmem:[%s310] sm:$0xf]
      %v354 = vld [vmem:[%s310 + $0x4] sm:$0xf]
      %v355 = vld [vmem:[%s310 + $0x8] sm:$0xf]
      %v356 = vld [vmem:[%s310 + $0xc] sm:$0xf]
      %v357 = vld [vmem:[%s304] sm:$0xff]
      %v358 = vld [vmem:[%s304 + $0x8] sm:$0xff]
      %v359 = vld [vmem:[%s304 + $0x10] sm:$0xff]
      %v360 = vld [vmem:[%s304 + $0x18] sm:$0xff]
      %v361 = vld [vmem:[%s304 + $0x20] sm:$0xff]
      %v362 = vld [vmem:[%s304 + $0x28] sm:$0xff]
      %v363 = vld [vmem:[%s304 + $0x30] sm:$0xff]
      %v364 = vld [vmem:[%s304 + $0x38] sm:$0xff]
      %v365 = vld [vmem:[%s316] sm:$0xff]
      %v366 = vld [vmem:[%s316 + $0x8] sm:$0xff]
      %v367 = vld [vmem:[%s316 + $0x10] sm:$0xff]
      %v368 = vld [vmem:[%s316 + $0x18] sm:$0xff]
      %370 = vset.pattern.permute.xlu0 0
      %371 = vperm.xlu0 %370, %v365
      %v372 = vpop.permute.xlu0 %371
      %375 = vset.pattern.permute.xlu0 0
      %376 = vperm.xlu0 %375, %v366
      %v377 = vpop.permute.xlu0 %376
      %380 = vset.pattern.permute.xlu0 0
      %381 = vperm.xlu0 %380, %v367
      %v382 = vpop.permute.xlu0 %381
      %385 = vset.pattern.permute.xlu0 0
      %386 = vperm.xlu0 %385, %v368
      %v387 = vpop.permute.xlu0 %386
      %v393 = vunpack.c.l.b16 %v353
      %v394 = vunpack.c.l.b16 %v354
      %v395 = vunpack.c.l.b16 %v355
      %v396 = vunpack.c.l.b16 %v356
      %v397 = vpack.c.b16 %v394, %v393
      %v398 = vpack.c.b16 %v396, %v395
      %v407 = vunpack.c.l.b16 %v357
      %v408 = vunpack.c.h.b16 %v357
      %v409 = vunpack.c.l.b16 %v358
      %v410 = vunpack.c.h.b16 %v358
      %v411 = vunpack.c.l.b16 %v359
      %v412 = vunpack.c.h.b16 %v359
      %v413 = vunpack.c.l.b16 %v360
      %v414 = vunpack.c.h.b16 %v360
      %v415 = vunpack.c.l.b16 %v361
      %v416 = vunpack.c.h.b16 %v361
      %v417 = vunpack.c.l.b16 %v362
      %v418 = vunpack.c.h.b16 %v362
      %v419 = vunpack.c.l.b16 %v363
      %v420 = vunpack.c.h.b16 %v363
      %v421 = vunpack.c.l.b16 %v364
      %v422 = vunpack.c.h.b16 %v364
      %v423 = vpack.c.b16 %v415, %v407
      %v424 = vpack.c.b16 %v416, %v408
      %v425 = vpack.c.b16 %v417, %v409
      %v426 = vpack.c.b16 %v418, %v410
      %v427 = vpack.c.b16 %v419, %v411
      %v428 = vpack.c.b16 %v420, %v412
      %v429 = vpack.c.b16 %v421, %v413
      %v430 = vpack.c.b16 %v422, %v414
      %vm439 = vcmask 130048
      %v441 = vsel %vm439, %v397, 0
      %v444 = vsel %vm439, %v398, 0
      %446 = vmatprep.subr.bf16.mxu0 %v424
      %447 = vmatpush1.bf16.msra.mxu0 %v423
      %448 = vmatprep.subr.bf16.mxu0 0
      %449 = vmatpush1.bf16.msra.mxu0 0
      %450 = vmatprep.subr.bf16.mxu0 0
      %451 = vmatpush1.bf16.msra.mxu0 0
      %452 = vmatprep.subr.bf16.mxu0 0
      %453 = vmatpush1.bf16.msra.mxu0 0
      %454 = vmatprep.subr.bf16.mxu0 0
      %455 = vmatpush1.bf16.msra.mxu0 0
      %456 = vmatprep.subr.bf16.mxu0 0
      %457 = vmatpush1.bf16.msra.mxu0 0
      %458 = vmatprep.subr.bf16.mxu0 0
      %459 = vmatpush1.bf16.msra.mxu0 0
      %460 = vmatprep.subr.bf16.mxu0 0
      %461 = vmatpush1.bf16.msra.mxu0 0
      %462 = vmatprep.subr.bf16.mxu0 0
      %463 = vmatpush1.bf16.msra.mxu0 0
      %464 = vmatprep.subr.bf16.mxu0 0
      %465 = vmatpush1.bf16.msra.mxu0 0
      %466 = vmatprep.subr.bf16.mxu0 0
      %467 = vmatpush1.bf16.msra.mxu0 0
      %468 = vmatprep.subr.bf16.mxu0 0
      %469 = vmatpush1.bf16.msra.mxu0 0
      %470 = vmatprep.subr.bf16.mxu0 0
      %471 = vmatpush1.bf16.msra.mxu0 0
      %472 = vmatprep.subr.bf16.mxu0 0
      %473 = vmatpush1.bf16.msra.mxu0 0
      %474 = vmatprep.subr.bf16.mxu0 0
      %475 = vmatpush1.bf16.msra.mxu0 0
      %476 = vmatprep.subr.bf16.mxu0 0
      %477 = vmatpush1.bf16.msra.mxu0 0
      %478 = vmatprep.mubr.bf16.mxu0 0
      %479 = vmatmul.mubr.bf16.gmra.mrb[0].mxu0 %v441
      %v480 = vpop.f32.mrb[0].mxu0
      %v481 = vadd.f32 %v372, %v480
      %v482 = vpop.f32.mrb[0].mxu0
      %v483 = vadd.f32 %v372, %v482
      %v484 = vpop.f32.mrb[0].mxu0
      %v485 = vadd.f32 %v377, %v484
      %v486 = vpop.f32.mrb[0].mxu0
      %v487 = vadd.f32 %v377, %v486
      %488 = vmatprep.mubr.bf16.mxu0 0
      %489 = vmatmul.mubr.bf16.gmra.mrb[0].mxu0 %v444
      %v490 = vpop.f32.mrb[0].mxu0
      %v491 = vadd.f32 %v382, %v490
      %v492 = vpop.f32.mrb[0].mxu0
      %v493 = vadd.f32 %v382, %v492
      %v494 = vpop.f32.mrb[0].mxu0
      %v495 = vadd.f32 %v387, %v494
      %v496 = vpop.f32.mrb[0].mxu0
      %v497 = vadd.f32 %v387, %v496
      %498 = vdwg.mxu0
      %499 = vmatprep.subr.bf16.mxu0 %v426
      %500 = vmatpush1.bf16.msra.mxu0 %v425
      %501 = vmatprep.subr.bf16.mxu0 0
      %502 = vmatpush1.bf16.msra.mxu0 0
      %503 = vmatprep.subr.bf16.mxu0 0
      %504 = vmatpush1.bf16.msra.mxu0 0
      %505 = vmatprep.subr.bf16.mxu0 0
      %506 = vmatpush1.bf16.msra.mxu0 0
      %507 = vmatprep.subr.bf16.mxu0 0
      %508 = vmatpush1.bf16.msra.mxu0 0
      %509 = vmatprep.subr.bf16.mxu0 0
      %510 = vmatpush1.bf16.msra.mxu0 0
      %511 = vmatprep.subr.bf16.mxu0 0
      %512 = vmatpush1.bf16.msra.mxu0 0
      %513 = vmatprep.subr.bf16.mxu0 0
      %514 = vmatpush1.bf16.msra.mxu0 0
      %515 = vmatprep.subr.bf16.mxu0 0
      %516 = vmatpush1.bf16.msra.mxu0 0
      %517 = vmatprep.subr.bf16.mxu0 0
      %518 = vmatpush1.bf16.msra.mxu0 0
      %519 = vmatprep.subr.bf16.mxu0 0
      %520 = vmatpush1.bf16.msra.mxu0 0
      %521 = vmatprep.subr.bf16.mxu0 0
      %522 = vmatpush1.bf16.msra.mxu0 0
      %523 = vmatprep.subr.bf16.mxu0 0
      %524 = vmatpush1.bf16.msra.mxu0 0
      %525 = vmatprep.subr.bf16.mxu0 0
      %526 = vmatpush1.bf16.msra.mxu0 0
      %527 = vmatprep.subr.bf16.mxu0 0
      %528 = vmatpush1.bf16.msra.mxu0 0
      %529 = vmatprep.subr.bf16.mxu0 0
      %530 = vmatpush1.bf16.msra.mxu0 0
      %531 = vmatprep.mubr.bf16.mxu0 0
      %532 = vmatmul.mubr.bf16.gmra.mrb[0].mxu0 %v441
      %v533 = vpop.f32.mrb[0].mxu0
      %v534 = vadd.f32 %v372, %v533
      %v535 = vpop.f32.mrb[0].mxu0
      %v536 = vadd.f32 %v372, %v535
      %v537 = vpop.f32.mrb[0].mxu0
      %v538 = vadd.f32 %v377, %v537
      %v539 = vpop.f32.mrb[0].mxu0
      %v540 = vadd.f32 %v377, %v539
      %541 = vmatprep.mubr.bf16.mxu0 0
      %542 = vmatmul.mubr.bf16.gmra.mrb[0].mxu0 %v444
      %v543 = vpop.f32.mrb[0].mxu0
      %v544 = vadd.f32 %v382, %v543
      %v545 = vpop.f32.mrb[0].mxu0
      %v546 = vadd.f32 %v382, %v545
      %v547 = vpop.f32.mrb[0].mxu0
      %v548 = vadd.f32 %v387, %v547
      %v549 = vpop.f32.mrb[0].mxu0
      %v550 = vadd.f32 %v387, %v549
      %551 = vdwg.mxu0
      %552 = vmatprep.subr.bf16.mxu0 %v428
      %553 = vmatpush1.bf16.msra.mxu0 %v427
      %554 = vmatprep.subr.bf16.mxu0 0
      %555 = vmatpush1.bf16.msra.mxu0 0
      %556 = vmatprep.subr.bf16.mxu0 0
      %557 = vmatpush1.bf16.msra.mxu0 0
      %558 = vmatprep.subr.bf16.mxu0 0
      %559 = vmatpush1.bf16.msra.mxu0 0
      %560 = vmatprep.subr.bf16.mxu0 0
      %561 = vmatpush1.bf16.msra.mxu0 0
      %562 = vmatprep.subr.bf16.mxu0 0
      %563 = vmatpush1.bf16.msra.mxu0 0
      %564 = vmatprep.subr.bf16.mxu0 0
      %565 = vmatpush1.bf16.msra.mxu0 0
      %566 = vmatprep.subr.bf16.mxu0 0
      %567 = vmatpush1.bf16.msra.mxu0 0
      %568 = vmatprep.subr.bf16.mxu0 0
      %569 = vmatpush1.bf16.msra.mxu0 0
      %570 = vmatprep.subr.bf16.mxu0 0
      %571 = vmatpush1.bf16.msra.mxu0 0
      %572 = vmatprep.subr.bf16.mxu0 0
      %573 = vmatpush1.bf16.msra.mxu0 0
      %574 = vmatprep.subr.bf16.mxu0 0
      %575 = vmatpush1.bf16.msra.mxu0 0
      %576 = vmatprep.subr.bf16.mxu0 0
      %577 = vmatpush1.bf16.msra.mxu0 0
      %578 = vmatprep.subr.bf16.mxu0 0
      %579 = vmatpush1.bf16.msra.mxu0 0
      %580 = vmatprep.subr.bf16.mxu0 0
      %581 = vmatpush1.bf16.msra.mxu0 0
      %582 = vmatprep.subr.bf16.mxu0 0
      %583 = vmatpush1.bf16.msra.mxu0 0
      %584 = vmatprep.mubr.bf16.mxu0 0
      %585 = vmatmul.mubr.bf16.gmra.mrb[0].mxu0 %v441
      %v586 = vpop.f32.mrb[0].mxu0
      %v587 = vadd.f32 %v372, %v586
      %v588 = vpop.f32.mrb[0].mxu0
      %v589 = vadd.f32 %v372, %v588
      %v590 = vpop.f32.mrb[0].mxu0
      %v591 = vadd.f32 %v377, %v590
      %v592 = vpop.f32.mrb[0].mxu0
      %v593 = vadd.f32 %v377, %v592
      %594 = vmatprep.mubr.bf16.mxu0 0
      %595 = vmatmul.mubr.bf16.gmra.mrb[0].mxu0 %v444
      %v596 = vpop.f32.mrb[0].mxu0
      %v597 = vadd.f32 %v382, %v596
      %v598 = vpop.f32.mrb[0].mxu0
      %v599 = vadd.f32 %v382, %v598
      %v600 = vpop.f32.mrb[0].mxu0
      %v601 = vadd.f32 %v387, %v600
      %v602 = vpop.f32.mrb[0].mxu0
      %v603 = vadd.f32 %v387, %v602
      %604 = vdwg.mxu0
      %605 = vmatprep.subr.bf16.mxu0 %v430
      %606 = vmatpush1.bf16.msra.mxu0 %v429
      %607 = vmatprep.subr.bf16.mxu0 0
      %608 = vmatpush1.bf16.msra.mxu0 0
      %609 = vmatprep.subr.bf16.mxu0 0
      %610 = vmatpush1.bf16.msra.mxu0 0
      %611 = vmatprep.subr.bf16.mxu0 0
      %612 = vmatpush1.bf16.msra.mxu0 0
      %613 = vmatprep.subr.bf16.mxu0 0
      %614 = vmatpush1.bf16.msra.mxu0 0
      %615 = vmatprep.subr.bf16.mxu0 0
      %616 = vmatpush1.bf16.msra.mxu0 0
      %617 = vmatprep.subr.bf16.mxu0 0
      %618 = vmatpush1.bf16.msra.mxu0 0
      %619 = vmatprep.subr.bf16.mxu0 0
      %620 = vmatpush1.bf16.msra.mxu0 0
      %621 = vmatprep.subr.bf16.mxu0 0
      %622 = vmatpush1.bf16.msra.mxu0 0
      %623 = vmatprep.subr.bf16.mxu0 0
      %624 = vmatpush1.bf16.msra.mxu0 0
      %625 = vmatprep.subr.bf16.mxu0 0
      %626 = vmatpush1.bf16.msra.mxu0 0
      %627 = vmatprep.subr.bf16.mxu0 0
      %628 = vmatpush1.bf16.msra.mxu0 0
      %629 = vmatprep.subr.bf16.mxu0 0
      %630 = vmatpush1.bf16.msra.mxu0 0
      %631 = vmatprep.subr.bf16.mxu0 0
      %632 = vmatpush1.bf16.msra.mxu0 0
      %633 = vmatprep.subr.bf16.mxu0 0
      %634 = vmatpush1.bf16.msra.mxu0 0
      %635 = vmatprep.subr.bf16.mxu0 0
      %636 = vmatpush1.bf16.msra.mxu0 0
      %637 = vmatprep.mubr.bf16.mxu0 0
      %638 = vmatmul.mubr.bf16.gmra.mrb[0].mxu0 %v441
      %v639 = vpop.f32.mrb[0].mxu0
      %v640 = vadd.f32 %v372, %v639
      %v641 = vpop.f32.mrb[0].mxu0
      %v642 = vadd.f32 %v372, %v641
      %v643 = vpop.f32.mrb[0].mxu0
      %v644 = vadd.f32 %v377, %v643
      %v645 = vpop.f32.mrb[0].mxu0
      %v646 = vadd.f32 %v377, %v645
      %647 = vmatprep.mubr.bf16.mxu0 0
      %648 = vmatmul.mubr.bf16.gmra.mrb[0].mxu0 %v444
      %v649 = vpop.f32.mrb[0].mxu0
      %v650 = vadd.f32 %v382, %v649
      %v651 = vpop.f32.mrb[0].mxu0
      %v652 = vadd.f32 %v382, %v651
      %v653 = vpop.f32.mrb[0].mxu0
      %v654 = vadd.f32 %v387, %v653
      %v655 = vpop.f32.mrb[0].mxu0
      %v656 = vadd.f32 %v387, %v655
      %657 = vdwg.mxu0
      %v658 = vmul.f32 %v481, 0.5
      %v659 = vmul.f32 %v483, 0.5
      %v660 = vmul.f32 %v534, 0.5
      %v661 = vmul.f32 %v536, 0.5
      %v662 = vmul.f32 %v587, 0.5
      %v663 = vmul.f32 %v589, 0.5
      %v664 = vmul.f32 %v640, 0.5
      %v665 = vmul.f32 %v642, 0.5
      %v666 = vmul.f32 %v485, 0.5
      %v667 = vmul.f32 %v487, 0.5
      %v668 = vmul.f32 %v538, 0.5
      %v669 = vmul.f32 %v540, 0.5
      %v670 = vmul.f32 %v591, 0.5
      %v671 = vmul.f32 %v593, 0.5
      %v672 = vmul.f32 %v644, 0.5
      %v673 = vmul.f32 %v646, 0.5
      %v674 = vmul.f32 %v491, 0.5
      %v675 = vmul.f32 %v493, 0.5
      %v676 = vmul.f32 %v544, 0.5
      %v677 = vmul.f32 %v546, 0.5
      %v678 = vmul.f32 %v597, 0.5
      %v679 = vmul.f32 %v599, 0.5
      %v680 = vmul.f32 %v650, 0.5
      %v681 = vmul.f32 %v652, 0.5
      %v682 = vmul.f32 %v495, 0.5
      %v683 = vmul.f32 %v497, 0.5
      %v684 = vmul.f32 %v548, 0.5
      %v685 = vmul.f32 %v550, 0.5
      %v686 = vmul.f32 %v601, 0.5
      %v687 = vmul.f32 %v603, 0.5
      %v688 = vmul.f32 %v654, 0.5
      %v689 = vmul.f32 %v656, 0.5
      %v690 = vmul.f32 %v481, 0.70710677
      %v691 = vmul.f32 %v483, 0.70710677
      %v692 = vmul.f32 %v534, 0.70710677
      %v693 = vmul.f32 %v536, 0.70710677
      %v694 = vmul.f32 %v587, 0.70710677
      %v695 = vmul.f32 %v589, 0.70710677
      %v696 = vmul.f32 %v640, 0.70710677
      %v697 = vmul.f32 %v642, 0.70710677
      %v698 = vmul.f32 %v485, 0.70710677
      %v699 = vmul.f32 %v487, 0.70710677
      %v700 = vmul.f32 %v538, 0.70710677
      %v701 = vmul.f32 %v540, 0.70710677
      %v702 = vmul.f32 %v591, 0.70710677
      %v703 = vmul.f32 %v593, 0.70710677
      %v704 = vmul.f32 %v644, 0.70710677
      %v705 = vmul.f32 %v646, 0.70710677
      %v706 = vmul.f32 %v491, 0.70710677
      %v707 = vmul.f32 %v493, 0.70710677
      %v708 = vmul.f32 %v544, 0.70710677
      %v709 = vmul.f32 %v546, 0.70710677
      %v710 = vmul.f32 %v597, 0.70710677
      %v711 = vmul.f32 %v599, 0.70710677
      %v712 = vmul.f32 %v650, 0.70710677
      %v713 = vmul.f32 %v652, 0.70710677
      %v714 = vmul.f32 %v495, 0.70710677
      %v715 = vmul.f32 %v497, 0.70710677
      %v716 = vmul.f32 %v548, 0.70710677
      %v717 = vmul.f32 %v550, 0.70710677
      %v718 = vmul.f32 %v601, 0.70710677
      %v719 = vmul.f32 %v603, 0.70710677
      %v720 = vmul.f32 %v654, 0.70710677
      %v721 = vmul.f32 %v656, 0.70710677
      %v722 = verf.f32.pop %v690
      %v723 = verf.f32.pop %v691
      %v724 = verf.f32.pop %v692
      %v725 = verf.f32.pop %v693
      %v726 = verf.f32.pop %v694
      %v727 = verf.f32.pop %v695
      %v728 = verf.f32.pop %v696
      %v729 = verf.f32.pop %v697
      %v730 = verf.f32.pop %v698
      %v731 = verf.f32.pop %v699
      %v732 = verf.f32.pop %v700
      %v733 = verf.f32.pop %v701
      %v734 = verf.f32.pop %v702
      %v735 = verf.f32.pop %v703
      %v736 = verf.f32.pop %v704
      %v737 = verf.f32.pop %v705
      %v738 = verf.f32.pop %v706
      %v739 = verf.f32.pop %v707
      %v740 = verf.f32.pop %v708
      %v741 = verf.f32.pop %v709
      %v742 = verf.f32.pop %v710
      %v743 = verf.f32.pop %v711
      %v744 = verf.f32.pop %v712
      %v745 = verf.f32.pop %v713
      %v746 = verf.f32.pop %v714
      %v747 = verf.f32.pop %v715
      %v748 = verf.f32.pop %v716
      %v749 = verf.f32.pop %v717
      %v750 = verf.f32.pop %v718
      %v751 = verf.f32.pop %v719
      %v752 = verf.f32.pop %v720
      %v753 = verf.f32.pop %v721
      %v754 = vadd.f32 %v722, 1.0
      %v755 = vadd.f32 %v723, 1.0
      %v756 = vadd.f32 %v724, 1.0
      %v757 = vadd.f32 %v725, 1.0
      %v758 = vadd.f32 %v726, 1.0
      %v759 = vadd.f32 %v727, 1.0
      %v760 = vadd.f32 %v728, 1.0
      %v761 = vadd.f32 %v729, 1.0
      %v762 = vadd.f32 %v730, 1.0
      %v763 = vadd.f32 %v731, 1.0
      %v764 = vadd.f32 %v732, 1.0
      %v765 = vadd.f32 %v733, 1.0
      %v766 = vadd.f32 %v734, 1.0
      %v767 = vadd.f32 %v735, 1.0
      %v768 = vadd.f32 %v736, 1.0
      %v769 = vadd.f32 %v737, 1.0
      %v770 = vadd.f32 %v738, 1.0
      %v771 = vadd.f32 %v739, 1.0
      %v772 = vadd.f32 %v740, 1.0
      %v773 = vadd.f32 %v741, 1.0
      %v774 = vadd.f32 %v742, 1.0
      %v775 = vadd.f32 %v743, 1.0
      %v776 = vadd.f32 %v744, 1.0
      %v777 = vadd.f32 %v745, 1.0
      %v778 = vadd.f32 %v746, 1.0
      %v779 = vadd.f32 %v747, 1.0
      %v780 = vadd.f32 %v748, 1.0
      %v781 = vadd.f32 %v749, 1.0
      %v782 = vadd.f32 %v750, 1.0
      %v783 = vadd.f32 %v751, 1.0
      %v784 = vadd.f32 %v752, 1.0
      %v785 = vadd.f32 %v753, 1.0
      %v786 = vmul.f32 %v658, %v754
      %v787 = vmul.f32 %v659, %v755
      %v788 = vmul.f32 %v660, %v756
      %v789 = vmul.f32 %v661, %v757
      %v790 = vmul.f32 %v662, %v758
      %v791 = vmul.f32 %v663, %v759
      %v792 = vmul.f32 %v664, %v760
      %v793 = vmul.f32 %v665, %v761
      %v794 = vmul.f32 %v666, %v762
      %v795 = vmul.f32 %v667, %v763
      %v796 = vmul.f32 %v668, %v764
      %v797 = vmul.f32 %v669, %v765
      %v798 = vmul.f32 %v670, %v766
      %v799 = vmul.f32 %v671, %v767
      %v800 = vmul.f32 %v672, %v768
      %v801 = vmul.f32 %v673, %v769
      %v802 = vmul.f32 %v674, %v770
      %v803 = vmul.f32 %v675, %v771
      %v804 = vmul.f32 %v676, %v772
      %v805 = vmul.f32 %v677, %v773
      %v806 = vmul.f32 %v678, %v774
      %v807 = vmul.f32 %v679, %v775
      %v808 = vmul.f32 %v680, %v776
      %v809 = vmul.f32 %v681, %v777
      %v810 = vmul.f32 %v682, %v778
      %v811 = vmul.f32 %v683, %v779
      %v812 = vmul.f32 %v684, %v780
      %v813 = vmul.f32 %v685, %v781
      %v814 = vmul.f32 %v686, %v782
      %v815 = vmul.f32 %v687, %v783
      %v816 = vmul.f32 %v688, %v784
      %v817 = vmul.f32 %v689, %v785
      %v818 = vld [vmem:[#allocation2] sm:$0xff]
      %v819 = vld [vmem:[#allocation2 + $0x8] sm:$0xff]
      %v820 = vld [vmem:[#allocation2 + $0x10] sm:$0xff]
      %v821 = vld [vmem:[#allocation2 + $0x18] sm:$0xff]
      %v822 = vld [vmem:[#allocation2 + $0x20] sm:$0xff]
      %v823 = vld [vmem:[#allocation2 + $0x28] sm:$0xff]
      %v824 = vld [vmem:[#allocation2 + $0x30] sm:$0xff]
      %v825 = vld [vmem:[#allocation2 + $0x38] sm:$0xff]
      %v826 = vld [vmem:[#allocation2 + $0x40] sm:$0xff]
      %v827 = vld [vmem:[#allocation2 + $0x48] sm:$0xff]
      %v828 = vld [vmem:[#allocation2 + $0x50] sm:$0xff]
      %v829 = vld [vmem:[#allocation2 + $0x58] sm:$0xff]
      %v830 = vld [vmem:[#allocation2 + $0x60] sm:$0xff]
      %v831 = vld [vmem:[#allocation2 + $0x68] sm:$0xff]
      %v832 = vld [vmem:[#allocation2 + $0x70] sm:$0xff]
      %v833 = vld [vmem:[#allocation2 + $0x78] sm:$0xff]
      %v834 = vld [vmem:[%s321] sm:$0xf]
      %v835 = vld [vmem:[%s321 + $0x4] sm:$0xf]
      %v836 = vpack.c.bf16 %v794, %v786
      %v837 = vpack.c.bf16 %v795, %v787
      %v838 = vpack.c.bf16 %v796, %v788
      %v839 = vpack.c.bf16 %v797, %v789
      %v840 = vpack.c.bf16 %v798, %v790
      %v841 = vpack.c.bf16 %v799, %v791
      %v842 = vpack.c.bf16 %v800, %v792
      %v843 = vpack.c.bf16 %v801, %v793
      %v844 = vpack.c.bf16 %v810, %v802
      %v845 = vpack.c.bf16 %v811, %v803
      %v846 = vpack.c.bf16 %v812, %v804
      %v847 = vpack.c.bf16 %v813, %v805
      %v848 = vpack.c.bf16 %v814, %v806
      %v849 = vpack.c.bf16 %v815, %v807
      %v850 = vpack.c.bf16 %v816, %v808
      %v851 = vpack.c.bf16 %v817, %v809
      %v854 = vunpack.c.l.b16 %v834
      %v855 = vunpack.c.l.b16 %v835
      %v856 = vpack.c.b16 %v855, %v854
      %vm857 = vcmask 261120
      %v859 = vsel %vm857, %v856, 0
      %861 = vmatprep.subr.bf16.mxu0 %v837
      %862 = vmatpush1.bf16.msra.mxu0 %v836
      %863 = vmatprep.subr.bf16.mxu0 %v845
      %864 = vmatpush1.bf16.msra.mxu0 %v844
      %865 = vmatprep.subr.bf16.mxu0 0
      %866 = vmatpush1.bf16.msra.mxu0 0
      %867 = vmatprep.subr.bf16.mxu0 0
      %868 = vmatpush1.bf16.msra.mxu0 0
      %869 = vmatprep.subr.bf16.mxu0 0
      %870 = vmatpush1.bf16.msra.mxu0 0
      %871 = vmatprep.subr.bf16.mxu0 0
      %872 = vmatpush1.bf16.msra.mxu0 0
      %873 = vmatprep.subr.bf16.mxu0 0
      %874 = vmatpush1.bf16.msra.mxu0 0
      %875 = vmatprep.subr.bf16.mxu0 0
      %876 = vmatpush1.bf16.msra.mxu0 0
      %877 = vmatprep.subr.bf16.mxu0 0
      %878 = vmatpush1.bf16.msra.mxu0 0
      %879 = vmatprep.subr.bf16.mxu0 0
      %880 = vmatpush1.bf16.msra.mxu0 0
      %881 = vmatprep.subr.bf16.mxu0 0
      %882 = vmatpush1.bf16.msra.mxu0 0
      %883 = vmatprep.subr.bf16.mxu0 0
      %884 = vmatpush1.bf16.msra.mxu0 0
      %885 = vmatprep.subr.bf16.mxu0 0
      %886 = vmatpush1.bf16.msra.mxu0 0
      %887 = vmatprep.subr.bf16.mxu0 0
      %888 = vmatpush1.bf16.msra.mxu0 0
      %889 = vmatprep.subr.bf16.mxu0 0
      %890 = vmatpush1.bf16.msra.mxu0 0
      %891 = vmatprep.subr.bf16.mxu0 0
      %892 = vmatpush1.bf16.msra.mxu0 0
      %893 = vmatprep.mubr.bf16.mxu0 0
      %894 = vmatmul.mubr.bf16.gmra.mrb[0].mxu0 %v859
      %v895 = vpop.f32.mrb[0].mxu0
      %v896 = vadd.f32 0.0, %v895
      %v897 = vpop.f32.mrb[0].mxu0
      %v898 = vadd.f32 0.0, %v897
      %v899 = vpop.f32.mrb[0].mxu0
      %v900 = vadd.f32 0.0, %v899
      %v901 = vpop.f32.mrb[0].mxu0
      %v902 = vadd.f32 0.0, %v901
      %903 = vdwg.mxu0
      %904 = vmatprep.subr.bf16.mxu0 %v839
      %905 = vmatpush1.bf16.msra.mxu0 %v838
      %906 = vmatprep.subr.bf16.mxu0 %v847
      %907 = vmatpush1.bf16.msra.mxu0 %v846
      %908 = vmatprep.subr.bf16.mxu0 0
      %909 = vmatpush1.bf16.msra.mxu0 0
      %910 = vmatprep.subr.bf16.mxu0 0
      %911 = vmatpush1.bf16.msra.mxu0 0
      %912 = vmatprep.subr.bf16.mxu0 0
      %913 = vmatpush1.bf16.msra.mxu0 0
      %914 = vmatprep.subr.bf16.mxu0 0
      %915 = vmatpush1.bf16.msra.mxu0 0
      %916 = vmatprep.subr.bf16.mxu0 0
      %917 = vmatpush1.bf16.msra.mxu0 0
      %918 = vmatprep.subr.bf16.mxu0 0
      %919 = vmatpush1.bf16.msra.mxu0 0
      %920 = vmatprep.subr.bf16.mxu0 0
      %921 = vmatpush1.bf16.msra.mxu0 0
      %922 = vmatprep.subr.bf16.mxu0 0
      %923 = vmatpush1.bf16.msra.mxu0 0
      %924 = vmatprep.subr.bf16.mxu0 0
      %925 = vmatpush1.bf16.msra.mxu0 0
      %926 = vmatprep.subr.bf16.mxu0 0
      %927 = vmatpush1.bf16.msra.mxu0 0
      %928 = vmatprep.subr.bf16.mxu0 0
      %929 = vmatpush1.bf16.msra.mxu0 0
      %930 = vmatprep.subr.bf16.mxu0 0
      %931 = vmatpush1.bf16.msra.mxu0 0
      %932 = vmatprep.subr.bf16.mxu0 0
      %933 = vmatpush1.bf16.msra.mxu0 0
      %934 = vmatprep.subr.bf16.mxu0 0
      %935 = vmatpush1.bf16.msra.mxu0 0
      %936 = vmatprep.mubr.bf16.mxu0 0
      %937 = vmatmul.mubr.bf16.gmra.mrb[0].mxu0 %v859
      %v938 = vpop.f32.mrb[0].mxu0
      %v939 = vadd.f32 0.0, %v938
      %v940 = vpop.f32.mrb[0].mxu0
      %v941 = vadd.f32 0.0, %v940
      %v942 = vpop.f32.mrb[0].mxu0
      %v943 = vadd.f32 0.0, %v942
      %v944 = vpop.f32.mrb[0].mxu0
      %v945 = vadd.f32 0.0, %v944
      %946 = vdwg.mxu0
      %947 = vmatprep.subr.bf16.mxu0 %v841
      %948 = vmatpush1.bf16.msra.mxu0 %v840
      %949 = vmatprep.subr.bf16.mxu0 %v849
      %950 = vmatpush1.bf16.msra.mxu0 %v848
      %951 = vmatprep.subr.bf16.mxu0 0
      %952 = vmatpush1.bf16.msra.mxu0 0
      %953 = vmatprep.subr.bf16.mxu0 0
      %954 = vmatpush1.bf16.msra.mxu0 0
      %955 = vmatprep.subr.bf16.mxu0 0
      %956 = vmatpush1.bf16.msra.mxu0 0
      %957 = vmatprep.subr.bf16.mxu0 0
      %958 = vmatpush1.bf16.msra.mxu0 0
      %959 = vmatprep.subr.bf16.mxu0 0
      %960 = vmatpush1.bf16.msra.mxu0 0
      %961 = vmatprep.subr.bf16.mxu0 0
      %962 = vmatpush1.bf16.msra.mxu0 0
      %963 = vmatprep.subr.bf16.mxu0 0
      %964 = vmatpush1.bf16.msra.mxu0 0
      %965 = vmatprep.subr.bf16.mxu0 0
      %966 = vmatpush1.bf16.msra.mxu0 0
      %967 = vmatprep.subr.bf16.mxu0 0
      %968 = vmatpush1.bf16.msra.mxu0 0
      %969 = vmatprep.subr.bf16.mxu0 0
      %970 = vmatpush1.bf16.msra.mxu0 0
      %971 = vmatprep.subr.bf16.mxu0 0
      %972 = vmatpush1.bf16.msra.mxu0 0
      %973 = vmatprep.subr.bf16.mxu0 0
      %974 = vmatpush1.bf16.msra.mxu0 0
      %975 = vmatprep.subr.bf16.mxu0 0
      %976 = vmatpush1.bf16.msra.mxu0 0
      %977 = vmatprep.subr.bf16.mxu0 0
      %978 = vmatpush1.bf16.msra.mxu0 0
      %979 = vmatprep.mubr.bf16.mxu0 0
      %980 = vmatmul.mubr.bf16.gmra.mrb[0].mxu0 %v859
      %v981 = vpop.f32.mrb[0].mxu0
      %v982 = vadd.f32 0.0, %v981
      %v983 = vpop.f32.mrb[0].mxu0
      %v984 = vadd.f32 0.0, %v983
      %v985 = vpop.f32.mrb[0].mxu0
      %v986 = vadd.f32 0.0, %v985
      %v987 = vpop.f32.mrb[0].mxu0
      %v988 = vadd.f32 0.0, %v987
      %989 = vdwg.mxu0
      %990 = vmatprep.subr.bf16.mxu0 %v843
      %991 = vmatpush1.bf16.msra.mxu0 %v842
      %992 = vmatprep.subr.bf16.mxu0 %v851
      %993 = vmatpush1.bf16.msra.mxu0 %v850
      %994 = vmatprep.subr.bf16.mxu0 0
      %995 = vmatpush1.bf16.msra.mxu0 0
      %996 = vmatprep.subr.bf16.mxu0 0
      %997 = vmatpush1.bf16.msra.mxu0 0
      %998 = vmatprep.subr.bf16.mxu0 0
      %999 = vmatpush1.bf16.msra.mxu0 0
      %1000 = vmatprep.subr.bf16.mxu0 0
      %1001 = vmatpush1.bf16.msra.mxu0 0
      %1002 = vmatprep.subr.bf16.mxu0 0
      %1003 = vmatpush1.bf16.msra.mxu0 0
      %1004 = vmatprep.subr.bf16.mxu0 0
      %1005 = vmatpush1.bf16.msra.mxu0 0
      %1006 = vmatprep.subr.bf16.mxu0 0
      %1007 = vmatpush1.bf16.msra.mxu0 0
      %1008 = vmatprep.subr.bf16.mxu0 0
      %1009 = vmatpush1.bf16.msra.mxu0 0
      %1010 = vmatprep.subr.bf16.mxu0 0
      %1011 = vmatpush1.bf16.msra.mxu0 0
      %1012 = vmatprep.subr.bf16.mxu0 0
      %1013 = vmatpush1.bf16.msra.mxu0 0
      %1014 = vmatprep.subr.bf16.mxu0 0
      %1015 = vmatpush1.bf16.msra.mxu0 0
      %1016 = vmatprep.subr.bf16.mxu0 0
      %1017 = vmatpush1.bf16.msra.mxu0 0
      %1018 = vmatprep.subr.bf16.mxu0 0
      %1019 = vmatpush1.bf16.msra.mxu0 0
      %1020 = vmatprep.subr.bf16.mxu0 0
      %1021 = vmatpush1.bf16.msra.mxu0 0
      %1022 = vmatprep.mubr.bf16.mxu0 0
      %1023 = vmatmul.mubr.bf16.gmra.mrb[0].mxu0 %v859
      %v1024 = vpop.f32.mrb[0].mxu0
      %v1025 = vadd.f32 0.0, %v1024
      %v1026 = vpop.f32.mrb[0].mxu0
      %v1027 = vadd.f32 0.0, %v1026
      %v1028 = vpop.f32.mrb[0].mxu0
      %v1029 = vadd.f32 0.0, %v1028
      %v1030 = vpop.f32.mrb[0].mxu0
      %v1031 = vadd.f32 0.0, %v1030
      %1032 = vdwg.mxu0
      %v1033 = vadd.f32 %v818, %v896
      %v1034 = vadd.f32 %v819, %v898
      %v1035 = vadd.f32 %v820, %v939
      %v1036 = vadd.f32 %v821, %v941
      %v1037 = vadd.f32 %v822, %v982
      %v1038 = vadd.f32 %v823, %v984
      %v1039 = vadd.f32 %v824, %v1025
      %v1040 = vadd.f32 %v825, %v1027
      %v1041 = vadd.f32 %v826, %v900
      %v1042 = vadd.f32 %v827, %v902
      %v1043 = vadd.f32 %v828, %v943
      %v1044 = vadd.f32 %v829, %v945
      %v1045 = vadd.f32 %v830, %v986
      %v1046 = vadd.f32 %v831, %v988
      %v1047 = vadd.f32 %v832, %v1029
      %v1048 = vadd.f32 %v833, %v1031
      %1049 = vst [vmem:[#allocation2] sm:$0xff] %v1033
      %1050 = vst [vmem:[#allocation2 + $0x8] sm:$0xff] %v1034
      %1051 = vst [vmem:[#allocation2 + $0x10] sm:$0xff] %v1035
      %1052 = vst [vmem:[#allocation2 + $0x18] sm:$0xff] %v1036
      %1053 = vst [vmem:[#allocation2 + $0x20] sm:$0xff] %v1037
      %1054 = vst [vmem:[#allocation2 + $0x28] sm:$0xff] %v1038
      %1055 = vst [vmem:[#allocation2 + $0x30] sm:$0xff] %v1039
      %1056 = vst [vmem:[#allocation2 + $0x38] sm:$0xff] %v1040
      %1057 = vst [vmem:[#allocation2 + $0x40] sm:$0xff] %v1041
      %1058 = vst [vmem:[#allocation2 + $0x48] sm:$0xff] %v1042
      %1059 = vst [vmem:[#allocation2 + $0x50] sm:$0xff] %v1043
      %1060 = vst [vmem:[#allocation2 + $0x58] sm:$0xff] %v1044
      %1061 = vst [vmem:[#allocation2 + $0x60] sm:$0xff] %v1045
      %1062 = vst [vmem:[#allocation2 + $0x68] sm:$0xff] %v1046
      %1063 = vst [vmem:[#allocation2 + $0x70] sm:$0xff] %v1047
      %1064 = vst [vmem:[#allocation2 + $0x78] sm:$0xff] %v1048
      // Predicated region
      $region45: #{mlp3d_forward.1} parent=39 // pred_check
        %p1065 = pneg %p333
      $region46: #{mlp3d_forward.1} parent=39 // pred_check_branch
        %1067 = sbr.rel (%p1065) target = $region48
      $region47: #{mlp3d_forward.1} parent=39 // pred_region
        %v1068 = vld [vmem:[#allocation2] sm:$0xff]
        %v1069 = vld [vmem:[#allocation2 + $0x8] sm:$0xff]
        %v1070 = vld [vmem:[#allocation2 + $0x10] sm:$0xff]
        %v1071 = vld [vmem:[#allocation2 + $0x18] sm:$0xff]
        %v1072 = vld [vmem:[#allocation2 + $0x20] sm:$0xff]
        %v1073 = vld [vmem:[#allocation2 + $0x28] sm:$0xff]
        %v1074 = vld [vmem:[#allocation2 + $0x30] sm:$0xff]
        %v1075 = vld [vmem:[#allocation2 + $0x38] sm:$0xff]
        %v1076 = vld [vmem:[#allocation2 + $0x40] sm:$0xff]
        %v1077 = vld [vmem:[#allocation2 + $0x48] sm:$0xff]
        %v1078 = vld [vmem:[#allocation2 + $0x50] sm:$0xff]
        %v1079 = vld [vmem:[#allocation2 + $0x58] sm:$0xff]
        %v1080 = vld [vmem:[#allocation2 + $0x60] sm:$0xff]
        %v1081 = vld [vmem:[#allocation2 + $0x68] sm:$0xff]
        %v1082 = vld [vmem:[#allocation2 + $0x70] sm:$0xff]
        %v1083 = vld [vmem:[#allocation2 + $0x78] sm:$0xff]
        %v1084 = vld [vmem:[%s4] sm:$0xff]
        %v1085 = vld [vmem:[%s4 + $0x8] sm:$0xff]
        %1087 = vset.pattern.permute.xlu0 0
        %1088 = vperm.xlu0 %1087, %v1084
        %v1089 = vpop.permute.xlu0 %1088
        %1092 = vset.pattern.permute.xlu0 0
        %1093 = vperm.xlu0 %1092, %v1085
        %v1094 = vpop.permute.xlu0 %1093
        %v1096 = vadd.f32 %v1068, %v1089
        %v1097 = vadd.f32 %v1069, %v1089
        %v1098 = vadd.f32 %v1070, %v1089
        %v1099 = vadd.f32 %v1071, %v1089
        %v1100 = vadd.f32 %v1072, %v1089
        %v1101 = vadd.f32 %v1073, %v1089
        %v1102 = vadd.f32 %v1074, %v1089
        %v1103 = vadd.f32 %v1075, %v1089
        %v1104 = vadd.f32 %v1076, %v1094
        %v1105 = vadd.f32 %v1077, %v1094
        %v1106 = vadd.f32 %v1078, %v1094
        %v1107 = vadd.f32 %v1079, %v1094
        %v1108 = vadd.f32 %v1080, %v1094
        %v1109 = vadd.f32 %v1081, %v1094
        %v1110 = vadd.f32 %v1082, %v1094
        %v1111 = vadd.f32 %v1083, %v1094
        %1112 = vst [vmem:[%s330] sm:$0xff] %v1096
        %1113 = vst [vmem:[%s330 + $0x8] sm:$0xff] %v1097
        %1114 = vst [vmem:[%s330 + $0x10] sm:$0xff] %v1098
        %1115 = vst [vmem:[%s330 + $0x18] sm:$0xff] %v1099
        %1116 = vst [vmem:[%s330 + $0x20] sm:$0xff] %v1100
        %1117 = vst [vmem:[%s330 + $0x28] sm:$0xff] %v1101
        %1118 = vst [vmem:[%s330 + $0x30] sm:$0xff] %v1102
        %1119 = vst [vmem:[%s330 + $0x38] sm:$0xff] %v1103
        %1120 = vst [vmem:[%s330 + $0x40] sm:$0xff] %v1104
        %1121 = vst [vmem:[%s330 + $0x48] sm:$0xff] %v1105
        %1122 = vst [vmem:[%s330 + $0x50] sm:$0xff] %v1106
        %1123 = vst [vmem:[%s330 + $0x58] sm:$0xff] %v1107
        %1124 = vst [vmem:[%s330 + $0x60] sm:$0xff] %v1108
        %1125 = vst [vmem:[%s330 + $0x68] sm:$0xff] %v1109
        %1126 = vst [vmem:[%s330 + $0x70] sm:$0xff] %v1110
        %1127 = vst [vmem:[%s330 + $0x78] sm:$0xff] %v1111
      $region48: #{mlp3d_forward.1} parent=39 // pred_fallthru
        _
      %s1128 = smul.u32 8, %s22
      %p1129 = scmp.lt.s32.totalorder %s21, 1
      %s1130 = scalar_select %p1129, %s21, 1
      %p1131 = scmp.lt.s32.totalorder %s1128, 7
      %s1132 = scalar_select %p1131, %s1128, 7
      %s1133 = smul.addr %s1130, 16
      %s1134 = sadd.s32 %s1132, %s1133
      %s1135 = smul.addr %s1134, 8
      %s1136 = scalar_lea.vmem %s5, %s1135
      // Predicated region
      $region49: #{mlp3d_forward.1} parent=39 // pred_check
        %p1137 = pneg %p182
      $region50: #{mlp3d_forward.1} parent=39 // pred_check_branch
        %1139 = sbr.rel (%p1137) target = $region52
      $region51: #{mlp3d_forward.1} parent=39 // pred_region
        %s1140 = smul.u32 8, %s22
      $region52: #{mlp3d_forward.1} parent=39 // pred_fallthru
        _
    $region40: #{mlp3d_forward.1} parent=5 // pred_fallthru
      _
    %p1141 = scmp.le.s32.totalorder 2, %s11
    // Predicated region
    $region53: #{mlp3d_forward.1} parent=5 // pred_check
      %p1142 = pneg %p1141
    $region54: #{mlp3d_forward.1} parent=5 // pred_check_branch
      %1144 = sbr.rel (%p1142) target = $region56
    $region55: #{mlp3d_forward.1} parent=5 // pred_region
      %s1145 = ssub.s32 %s11, 2
      // Predicated region
      $region57: #{mlp3d_forward.1} parent=55 // pred_check
        %p1146 = pneg %p188
      $region58: #{mlp3d_forward.1} parent=55 // pred_check_branch
        %1148 = sbr.rel (%p1146) target = $region60
      $region59: #{mlp3d_forward.1} parent=55 // pred_region
        %s1149 = smul.u32 8, %s25
        %p1150 = scmp.lt.s32.totalorder %s24, 1
        %s1151 = scalar_select %p1150, %s24, 1
        %p1152 = scmp.lt.s32.totalorder %s1149, 7
        %s1153 = scalar_select %p1152, %s1149, 7
        %s1154 = smul.addr %s1151, 16
        %s1155 = sadd.s32 %s1153, %s1154
        %s1156 = smul.addr %s1155, 8
        %s1157 = scalar_lea.vmem %s5, %s1156
      $region60: #{mlp3d_forward.1} parent=55 // pred_fallthru
        _
    $region56: #{mlp3d_forward.1} parent=5 // pred_fallthru
      _
  $region6: #{mlp3d_forward.1} parent=0 // loop_footer
    %s15 = sadd.s32 1, %s11
  $region7: #{mlp3d_forward.1} parent=0 // loop_footer_branch
    %10 = sbr.rel target = $region3
  $region8: #{mlp3d_forward.1} parent=0 // loop_exit
    _

</llo_original>
